<compile_context>
chip_gen: v7x
topology: tpu7x:2x2x1
jax: 0.10.0
libtpu: 0.0.40
codegen_flags: <defaults>
</compile_context>

<pallas_src>
import functools

import jax
import jax.numpy as jnp
import numpy as np
from jax.experimental import pallas as pl
from jax.experimental.pallas import tpu as pltpu

KH = KW = 3  # kernel_size=3, padding=1 ("same"), bias=False


def _resblock_kernel(x_ref, w1_ref, w2_ref, o_ref, col_ref, *, H, W):
    # x_ref  : [NB, C, P]   input block, P = H*W (lane-dense minor axis)
    # w1/w2  : [C, 9*C]     packed weights, column = (ky*3 + kx)*C + ci
    # o_ref  : [NB, C, P]   output block
    # col_ref: [9*C, P]     VMEM im2col scratch (rebuilt for every conv)
    NB, C, P = x_ref.shape

    # --- per-tap validity masks (built once, reused by both convs) ----------
    # Output pixel p = y*W + x.  Tap (ky, kx) reads flattened p + off with
    # off = (ky-1)*W + (kx-1); the mask zeroes taps whose 2-D source pixel is
    # outside the image -- exactly the pixels jnp.roll wraps around.
    idx = jax.lax.broadcasted_iota(jnp.int32, (C, P), 1)   # flattened pixel id
    if (W & (W - 1)) == 0:                                   # W is a power of two
        colx = jnp.bitwise_and(idx, W - 1)                   # x coordinate
    else:
        colx = jnp.remainder(idx, W)                         # general-W fallback
    has_up = idx >= W          # y >= 1      (taps with ky == 0)
    has_dn = idx < P - W       # y <= H - 2  (taps with ky == 2)
    has_lf = colx >= 1         # x >= 1      (taps with kx == 0)
    has_rt = colx <= W - 2     # x <= W - 2  (taps with kx == 2)

    def tap_mask(ky, kx):
        conds = []
        if ky == 0:
            conds.append(has_up)
        elif ky == 2:
            conds.append(has_dn)
        if kx == 0:
            conds.append(has_lf)
        elif kx == 2:
            conds.append(has_rt)
        if not conds:
            return None                      # centre tap: always valid
        m = conds[0]
        for c in conds[1:]:
            m = jnp.logical_and(m, c)
        return m

    masks = [tap_mask(ky, kx) for ky in range(KH) for kx in range(KW)]

    # Whole weight tiles loaded once; no per-lane weight slicing.
    w1 = w1_ref[...].astype(jnp.float32)
    w2 = w2_ref[...].astype(jnp.float32)

    def conv3x3(img, w):
        # img: [C, P] f32 already in registers.  Build the [9C, P] im2col
        # stack (9 register lane-shifts + masks), then one MXU dot.
        for t in range(KH * KW):
            ky, kx = divmod(t, KW)
            off = (ky - 1) * W + (kx - 1)
            tap = img if off == 0 else jnp.roll(img, -off, axis=-1)
            m = masks[t]
            if m is not None:
                tap = jnp.where(m, tap, 0.0)
            col_ref[t * C:(t + 1) * C, :] = tap
        return jnp.dot(w, col_ref[...], preferred_element_type=jnp.float32)

    for b in range(NB):                       # static unroll over the block
        xb = x_ref[b].astype(jnp.float32)     # [C, P]; also the residual
        y = jnp.maximum(conv3x3(xb, w1), 0.0)
        y = conv3x3(y, w2)
        o_ref[b] = (xb + y).astype(o_ref.dtype)


def resblock_pallas(x_nchw, w1_oihw, w2_oihw, *, images_per_block=None):
    """ResBlock forward. x: [N, C, H, W]; weights: [C, C, 3, 3] (PyTorch OIHW)."""
    N, C, H, W = x_nchw.shape
    assert H >= 2 and W >= 2, "border masks assume H >= 2 and W >= 2"
    P = H * W

    if images_per_block is None:
        # Keep >= 2 'parallel' grid steps when possible so both v7x
        # TensorCores get work; for larger even batches several images share
        # one step so the fixed per-step pipeline overhead is amortized.
        images_per_block = N // 2 if (N >= 2 and N % 2 == 0) else 1
    assert N % images_per_block == 0
    num_blocks = N // images_per_block

    # NCHW -> [N, C, H*W] is a pure reshape: no transpose, no extra HBM trip.
    x = x_nchw.reshape(N, C, P)
    # Pack weights: [C_out, C_in, 3, 3] -> [C_out, 9*C_in], column index
    # (ky*3 + kx)*C_in + ci (matches the im2col row order).  Tiny; once/call.
    w1p = jnp.transpose(w1_oihw, (0, 2, 3, 1)).reshape(C, KH * KW * C)
    w2p = jnp.transpose(w2_oihw, (0, 2, 3, 1)).reshape(C, KH * KW * C)

    kernel = functools.partial(_resblock_kernel, H=H, W=W)

    out = pl.pallas_call(
        kernel,
        out_shape=jax.ShapeDtypeStruct((N, C, P), x_nchw.dtype),
        grid_spec=pltpu.PrefetchScalarGridSpec(
            num_scalar_prefetch=0,
            grid=(num_blocks,),
            in_specs=[
                pl.BlockSpec((images_per_block, C, P), lambda n: (n, 0, 0)),
                pl.BlockSpec((C, KH * KW * C), lambda n: (0, 0)),
                pl.BlockSpec((C, KH * KW * C), lambda n: (0, 0)),
            ],
            out_specs=pl.BlockSpec((images_per_block, C, P),
                                   lambda n: (n, 0, 0)),
            scratch_shapes=[pltpu.VMEM((KH * KW * C, P), jnp.float32)],
        ),
        compiler_params=pltpu.CompilerParams(
            dimension_semantics=("parallel",)),
    )(x, w1p, w2p)

    return out.reshape(N, C, H, W)


def resblock_ref(x, w1, w2):
    """Pure-JAX reference matching the PyTorch module semantics (NCHW)."""
    dn = ("NCHW", "OIHW", "NCHW")
    y = jax.lax.conv_general_dilated(x, w1, (1, 1), ((1, 1), (1, 1)),
                                     dimension_numbers=dn)
    y = jnp.maximum(y, 0.0)
    y = jax.lax.conv_general_dilated(y, w2, (1, 1), ((1, 1), (1, 1)),
                                     dimension_numbers=dn)
    return x + y


if __name__ == "__main__":
    # ResBlock(num_features=4) on a 2x4x16x16 input.
    N, C, H, W = 2, 4, 16, 16
    key = jax.random.PRNGKey(0)
    kx, k1, k2 = jax.random.split(key, 3)

    x = jax.random.normal(kx, (N, C, H, W), dtype=jnp.float32)
    # PyTorch Conv2d weight shape: [out, in, kh, kw]
    w1 = 0.1 * jax.random.normal(k1, (C, C, KH, KW), dtype=jnp.float32)
    w2 = 0.1 * jax.random.normal(k2, (C, C, KH, KW), dtype=jnp.float32)

    out = jax.block_until_ready(resblock_pallas(x, w1, w2))
    ref = jax.block_until_ready(resblock_ref(x, w1, w2))

    # Tolerance covers possible MXU f32 pass-structure differences between the
    # in-kernel dot and XLA's conv reference; structural bugs would be O(1).
    np.testing.assert_allclose(np.asarray(out), np.asarray(ref),
                               rtol=1e-2, atol=1e-2)
    print("KERNEL_OK")
</pallas_src>

<mosaic_0001>
module attributes {stable_mosaic.version = 11 : i64} {
  func.func @_resblock_kernel(%arg0: i32, %arg1: memref<1x4x256xf32, #tpu.memory_space<vmem>>, %arg2: memref<4x36xf32, #tpu.memory_space<vmem>>, %arg3: memref<4x36xf32, #tpu.memory_space<vmem>>, %arg4: memref<1x4x256xf32, #tpu.memory_space<vmem>>, %arg5: memref<36x256xf32, #tpu.memory_space<vmem>>) attributes {dimension_semantics = [#tpu.dimension_semantics<parallel>], iteration_bounds = array<i64: 2>, scalar_prefetch = 0 : i64, scratch_operands = 1 : i64, tpu.core_type = #tpu.core_type<tc>, window_params = [{transform_indices = @transform_0, window_bounds = array<i64: 1, 4, 256>}, {pipeline_mode = #tpu.pipeline_mode<synchronous>, transform_indices = @transform_1, window_bounds = array<i64: 4, 36>}, {pipeline_mode = #tpu.pipeline_mode<synchronous>, transform_indices = @transform_2, window_bounds = array<i64: 4, 36>}, {transform_indices = @transform_3, window_bounds = array<i64: 1, 4, 256>}]} {
    %0 = tpu.iota {dimensions = array<i32: 1>} : vector<4x256xi32>
    %c15_i32 = arith.constant 15 : i32
    %1 = vector.broadcast %c15_i32 : i32 to vector<4x256xi32>
    %2 = arith.andi %0, %1 : vector<4x256xi32>
    %c16_i32 = arith.constant 16 : i32
    %3 = vector.broadcast %c16_i32 : i32 to vector<4x256xi32>
    %4 = arith.cmpi sge, %0, %3 : vector<4x256xi32>
    %c240_i32 = arith.constant 240 : i32
    %5 = vector.broadcast %c240_i32 : i32 to vector<4x256xi32>
    %6 = arith.cmpi slt, %0, %5 : vector<4x256xi32>
    %c1_i32 = arith.constant 1 : i32
    %7 = vector.broadcast %c1_i32 : i32 to vector<4x256xi32>
    %8 = arith.cmpi sge, %2, %7 : vector<4x256xi32>
    %c14_i32 = arith.constant 14 : i32
    %9 = vector.broadcast %c14_i32 : i32 to vector<4x256xi32>
    %10 = arith.cmpi sle, %2, %9 : vector<4x256xi32>
    %11 = arith.andi %4, %8 : vector<4x256xi1>
    %12 = arith.andi %4, %10 : vector<4x256xi1>
    %13 = arith.andi %6, %8 : vector<4x256xi1>
    %14 = arith.andi %6, %10 : vector<4x256xi1>
    %c0 = arith.constant 0 : index
    %c0_0 = arith.constant 0 : index
    %15 = vector.load %arg2[%c0, %c0_0] : memref<4x36xf32, #tpu.memory_space<vmem>>, vector<4x36xf32>
    %c0_1 = arith.constant 0 : index
    %c0_2 = arith.constant 0 : index
    %16 = vector.load %arg3[%c0_1, %c0_2] : memref<4x36xf32, #tpu.memory_space<vmem>>, vector<4x36xf32>
    %c0_3 = arith.constant 0 : index
    %c0_4 = arith.constant 0 : index
    %c0_5 = arith.constant 0 : index
    %17 = vector.load %arg1[%c0_3, %c0_4, %c0_5] : memref<1x4x256xf32, #tpu.memory_space<vmem>>, vector<1x4x256xf32>
    %18 = vector.shape_cast %17 : vector<1x4x256xf32> to vector<4x256xf32>
    %19 = vector.extract_strided_slice %18 {offsets = [0, 239], sizes = [4, 17], strides = [1, 1]} : vector<4x256xf32> to vector<4x17xf32>
    %20 = vector.extract_strided_slice %18 {offsets = [0, 0], sizes = [4, 239], strides = [1, 1]} : vector<4x256xf32> to vector<4x239xf32>
    %21 = tpu.concatenate %19, %20 in 1 : vector<4x17xf32>, vector<4x239xf32> -> vector<4x256xf32>
    %cst = arith.constant 0.000000e+00 : f32
    %22 = vector.broadcast %cst : f32 to vector<4x256xf32>
    %23 = arith.select %11, %21, %22 : vector<4x256xi1>, vector<4x256xf32>
    %c0_6 = arith.constant 0 : index
    %c0_7 = arith.constant 0 : index
    %24 = vector.load %arg5[%c0_6, %c0_7] : memref<36x256xf32, #tpu.memory_space<vmem>>, vector<4x256xf32>
    tpu.vector_store %arg5[%c0_6, %c0_7], %23 {strides = array<i32>} : memref<36x256xf32, #tpu.memory_space<vmem>>, vector<4x256xf32>,
    %25 = vector.extract_strided_slice %18 {offsets = [0, 240], sizes = [4, 16], strides = [1, 1]} : vector<4x256xf32> to vector<4x16xf32>
    %26 = vector.extract_strided_slice %18 {offsets = [0, 0], sizes = [4, 240], strides = [1, 1]} : vector<4x256xf32> to vector<4x240xf32>
    %27 = tpu.concatenate %25, %26 in 1 : vector<4x16xf32>, vector<4x240xf32> -> vector<4x256xf32>
    %cst_8 = arith.constant 0.000000e+00 : f32
    %28 = vector.broadcast %cst_8 : f32 to vector<4x256xf32>
    %29 = arith.select %4, %27, %28 : vector<4x256xi1>, vector<4x256xf32>
    %c4 = arith.constant 4 : index
    %c0_9 = arith.constant 0 : index
    %30 = vector.load %arg5[%c4, %c0_9] : memref<36x256xf32, #tpu.memory_space<vmem>>, vector<4x256xf32>
    tpu.vector_store %arg5[%c4, %c0_9], %29 {strides = array<i32>} : memref<36x256xf32, #tpu.memory_space<vmem>>, vector<4x256xf32>,
    %31 = vector.extract_strided_slice %18 {offsets = [0, 241], sizes = [4, 15], strides = [1, 1]} : vector<4x256xf32> to vector<4x15xf32>
    %32 = vector.extract_strided_slice %18 {offsets = [0, 0], sizes = [4, 241], strides = [1, 1]} : vector<4x256xf32> to vector<4x241xf32>
    %33 = tpu.concatenate %31, %32 in 1 : vector<4x15xf32>, vector<4x241xf32> -> vector<4x256xf32>
    %cst_10 = arith.constant 0.000000e+00 : f32
    %34 = vector.broadcast %cst_10 : f32 to vector<4x256xf32>
    %35 = arith.select %12, %33, %34 : vector<4x256xi1>, vector<4x256xf32>
    %c8 = arith.constant 8 : index
    %c0_11 = arith.constant 0 : index
    %36 = vector.load %arg5[%c8, %c0_11] : memref<36x256xf32, #tpu.memory_space<vmem>>, vector<4x256xf32>
    tpu.vector_store %arg5[%c8, %c0_11], %35 {strides = array<i32>} : memref<36x256xf32, #tpu.memory_space<vmem>>, vector<4x256xf32>,
    %37 = vector.extract_strided_slice %18 {offsets = [0, 255], sizes = [4, 1], strides = [1, 1]} : vector<4x256xf32> to vector<4x1xf32>
    %38 = vector.extract_strided_slice %18 {offsets = [0, 0], sizes = [4, 255], strides = [1, 1]} : vector<4x256xf32> to vector<4x255xf32>
    %39 = tpu.concatenate %37, %38 in 1 : vector<4x1xf32>, vector<4x255xf32> -> vector<4x256xf32>
    %cst_12 = arith.constant 0.000000e+00 : f32
    %40 = vector.broadcast %cst_12 : f32 to vector<4x256xf32>
    %41 = arith.select %8, %39, %40 : vector<4x256xi1>, vector<4x256xf32>
    %c12 = arith.constant 12 : index
    %c0_13 = arith.constant 0 : index
    %42 = vector.load %arg5[%c12, %c0_13] : memref<36x256xf32, #tpu.memory_space<vmem>>, vector<4x256xf32>
    tpu.vector_store %arg5[%c12, %c0_13], %41 {strides = array<i32>} : memref<36x256xf32, #tpu.memory_space<vmem>>, vector<4x256xf32>,
    %c16 = arith.constant 16 : index
    %c0_14 = arith.constant 0 : index
    %43 = vector.load %arg5[%c16, %c0_14] : memref<36x256xf32, #tpu.memory_space<vmem>>, vector<4x256xf32>
    tpu.vector_store %arg5[%c16, %c0_14], %18 {strides = array<i32>} : memref<36x256xf32, #tpu.memory_space<vmem>>, vector<4x256xf32>,
    %44 = vector.extract_strided_slice %18 {offsets = [0, 1], sizes = [4, 255], strides = [1, 1]} : vector<4x256xf32> to vector<4x255xf32>
    %45 = vector.extract_strided_slice %18 {offsets = [0, 0], sizes = [4, 1], strides = [1, 1]} : vector<4x256xf32> to vector<4x1xf32>
    %46 = tpu.concatenate %44, %45 in 1 : vector<4x255xf32>, vector<4x1xf32> -> vector<4x256xf32>
    %cst_15 = arith.constant 0.000000e+00 : f32
    %47 = vector.broadcast %cst_15 : f32 to vector<4x256xf32>
    %48 = arith.select %10, %46, %47 : vector<4x256xi1>, vector<4x256xf32>
    %c20 = arith.constant 20 : index
    %c0_16 = arith.constant 0 : index
    %49 = vector.load %arg5[%c20, %c0_16] : memref<36x256xf32, #tpu.memory_space<vmem>>, vector<4x256xf32>
    tpu.vector_store %arg5[%c20, %c0_16], %48 {strides = array<i32>} : memref<36x256xf32, #tpu.memory_space<vmem>>, vector<4x256xf32>,
    %50 = vector.extract_strided_slice %18 {offsets = [0, 15], sizes = [4, 241], strides = [1, 1]} : vector<4x256xf32> to vector<4x241xf32>
    %51 = vector.extract_strided_slice %18 {offsets = [0, 0], sizes = [4, 15], strides = [1, 1]} : vector<4x256xf32> to vector<4x15xf32>
    %52 = tpu.concatenate %50, %51 in 1 : vector<4x241xf32>, vector<4x15xf32> -> vector<4x256xf32>
    %cst_17 = arith.constant 0.000000e+00 : f32
    %53 = vector.broadcast %cst_17 : f32 to vector<4x256xf32>
    %54 = arith.select %13, %52, %53 : vector<4x256xi1>, vector<4x256xf32>
    %c24 = arith.constant 24 : index
    %c0_18 = arith.constant 0 : index
    %55 = vector.load %arg5[%c24, %c0_18] : memref<36x256xf32, #tpu.memory_space<vmem>>, vector<4x256xf32>
    tpu.vector_store %arg5[%c24, %c0_18], %54 {strides = array<i32>} : memref<36x256xf32, #tpu.memory_space<vmem>>, vector<4x256xf32>,
    %56 = vector.extract_strided_slice %18 {offsets = [0, 16], sizes = [4, 240], strides = [1, 1]} : vector<4x256xf32> to vector<4x240xf32>
    %57 = vector.extract_strided_slice %18 {offsets = [0, 0], sizes = [4, 16], strides = [1, 1]} : vector<4x256xf32> to vector<4x16xf32>
    %58 = tpu.concatenate %56, %57 in 1 : vector<4x240xf32>, vector<4x16xf32> -> vector<4x256xf32>
    %cst_19 = arith.constant 0.000000e+00 : f32
    %59 = vector.broadcast %cst_19 : f32 to vector<4x256xf32>
    %60 = arith.select %6, %58, %59 : vector<4x256xi1>, vector<4x256xf32>
    %c28 = arith.constant 28 : index
    %c0_20 = arith.constant 0 : index
    %61 = vector.load %arg5[%c28, %c0_20] : memref<36x256xf32, #tpu.memory_space<vmem>>, vector<4x256xf32>
    tpu.vector_store %arg5[%c28, %c0_20], %60 {strides = array<i32>} : memref<36x256xf32, #tpu.memory_space<vmem>>, vector<4x256xf32>,
    %62 = vector.extract_strided_slice %18 {offsets = [0, 17], sizes = [4, 239], strides = [1, 1]} : vector<4x256xf32> to vector<4x239xf32>
    %63 = vector.extract_strided_slice %18 {offsets = [0, 0], sizes = [4, 17], strides = [1, 1]} : vector<4x256xf32> to vector<4x17xf32>
    %64 = tpu.concatenate %62, %63 in 1 : vector<4x239xf32>, vector<4x17xf32> -> vector<4x256xf32>
    %cst_21 = arith.constant 0.000000e+00 : f32
    %65 = vector.broadcast %cst_21 : f32 to vector<4x256xf32>
    %66 = arith.select %14, %64, %65 : vector<4x256xi1>, vector<4x256xf32>
    %c32 = arith.constant 32 : index
    %c0_22 = arith.constant 0 : index
    %67 = vector.load %arg5[%c32, %c0_22] : memref<36x256xf32, #tpu.memory_space<vmem>>, vector<4x256xf32>
    tpu.vector_store %arg5[%c32, %c0_22], %66 {strides = array<i32>} : memref<36x256xf32, #tpu.memory_space<vmem>>, vector<4x256xf32>,
    %c0_23 = arith.constant 0 : index
    %c0_24 = arith.constant 0 : index
    %68 = vector.load %arg5[%c0_23, %c0_24] : memref<36x256xf32, #tpu.memory_space<vmem>>, vector<36x256xf32>
    %cst_25 = arith.constant dense<0.000000e+00> : vector<4x256xf32>
    %69 = tpu.matmul %15, %68, %cst_25 {dimension_numbers = #tpu.dot_dimension_numbers<[1], [0], [0], [1], [0, 0, 1, 1], [], []>} : vector<4x36xf32>, vector<36x256xf32>, vector<4x256xf32> -> vector<4x256xf32>
    %cst_26 = arith.constant 0.000000e+00 : f32
    %70 = vector.broadcast %cst_26 : f32 to vector<4x256xf32>
    %71 = arith.maximumf %69, %70 : vector<4x256xf32>
    %72 = vector.extract_strided_slice %71 {offsets = [0, 239], sizes = [4, 17], strides = [1, 1]} : vector<4x256xf32> to vector<4x17xf32>
    %73 = vector.extract_strided_slice %71 {offsets = [0, 0], sizes = [4, 239], strides = [1, 1]} : vector<4x256xf32> to vector<4x239xf32>
    %74 = tpu.concatenate %72, %73 in 1 : vector<4x17xf32>, vector<4x239xf32> -> vector<4x256xf32>
    %cst_27 = arith.constant 0.000000e+00 : f32
    %75 = vector.broadcast %cst_27 : f32 to vector<4x256xf32>
    %76 = arith.select %11, %74, %75 : vector<4x256xi1>, vector<4x256xf32>
    %c0_28 = arith.constant 0 : index
    %c0_29 = arith.constant 0 : index
    %77 = vector.load %arg5[%c0_28, %c0_29] : memref<36x256xf32, #tpu.memory_space<vmem>>, vector<4x256xf32>
    tpu.vector_store %arg5[%c0_28, %c0_29], %76 {strides = array<i32>} : memref<36x256xf32, #tpu.memory_space<vmem>>, vector<4x256xf32>,
    %78 = vector.extract_strided_slice %71 {offsets = [0, 240], sizes = [4, 16], strides = [1, 1]} : vector<4x256xf32> to vector<4x16xf32>
    %79 = vector.extract_strided_slice %71 {offsets = [0, 0], sizes = [4, 240], strides = [1, 1]} : vector<4x256xf32> to vector<4x240xf32>
    %80 = tpu.concatenate %78, %79 in 1 : vector<4x16xf32>, vector<4x240xf32> -> vector<4x256xf32>
    %cst_30 = arith.constant 0.000000e+00 : f32
    %81 = vector.broadcast %cst_30 : f32 to vector<4x256xf32>
    %82 = arith.select %4, %80, %81 : vector<4x256xi1>, vector<4x256xf32>
    %c4_31 = arith.constant 4 : index
    %c0_32 = arith.constant 0 : index
    %83 = vector.load %arg5[%c4_31, %c0_32] : memref<36x256xf32, #tpu.memory_space<vmem>>, vector<4x256xf32>
    tpu.vector_store %arg5[%c4_31, %c0_32], %82 {strides = array<i32>} : memref<36x256xf32, #tpu.memory_space<vmem>>, vector<4x256xf32>,
    %84 = vector.extract_strided_slice %71 {offsets = [0, 241], sizes = [4, 15], strides = [1, 1]} : vector<4x256xf32> to vector<4x15xf32>
    %85 = vector.extract_strided_slice %71 {offsets = [0, 0], sizes = [4, 241], strides = [1, 1]} : vector<4x256xf32> to vector<4x241xf32>
    %86 = tpu.concatenate %84, %85 in 1 : vector<4x15xf32>, vector<4x241xf32> -> vector<4x256xf32>
    %cst_33 = arith.constant 0.000000e+00 : f32
    %87 = vector.broadcast %cst_33 : f32 to vector<4x256xf32>
    %88 = arith.select %12, %86, %87 : vector<4x256xi1>, vector<4x256xf32>
    %c8_34 = arith.constant 8 : index
    %c0_35 = arith.constant 0 : index
    %89 = vector.load %arg5[%c8_34, %c0_35] : memref<36x256xf32, #tpu.memory_space<vmem>>, vector<4x256xf32>
    tpu.vector_store %arg5[%c8_34, %c0_35], %88 {strides = array<i32>} : memref<36x256xf32, #tpu.memory_space<vmem>>, vector<4x256xf32>,
    %90 = vector.extract_strided_slice %71 {offsets = [0, 255], sizes = [4, 1], strides = [1, 1]} : vector<4x256xf32> to vector<4x1xf32>
    %91 = vector.extract_strided_slice %71 {offsets = [0, 0], sizes = [4, 255], strides = [1, 1]} : vector<4x256xf32> to vector<4x255xf32>
    %92 = tpu.concatenate %90, %91 in 1 : vector<4x1xf32>, vector<4x255xf32> -> vector<4x256xf32>
    %cst_36 = arith.constant 0.000000e+00 : f32
    %93 = vector.broadcast %cst_36 : f32 to vector<4x256xf32>
    %94 = arith.select %8, %92, %93 : vector<4x256xi1>, vector<4x256xf32>
    %c12_37 = arith.constant 12 : index
    %c0_38 = arith.constant 0 : index
    %95 = vector.load %arg5[%c12_37, %c0_38] : memref<36x256xf32, #tpu.memory_space<vmem>>, vector<4x256xf32>
    tpu.vector_store %arg5[%c12_37, %c0_38], %94 {strides = array<i32>} : memref<36x256xf32, #tpu.memory_space<vmem>>, vector<4x256xf32>,
    %c16_39 = arith.constant 16 : index
    %c0_40 = arith.constant 0 : index
    %96 = vector.load %arg5[%c16_39, %c0_40] : memref<36x256xf32, #tpu.memory_space<vmem>>, vector<4x256xf32>
    tpu.vector_store %arg5[%c16_39, %c0_40], %71 {strides = array<i32>} : memref<36x256xf32, #tpu.memory_space<vmem>>, vector<4x256xf32>,
    %97 = vector.extract_strided_slice %71 {offsets = [0, 1], sizes = [4, 255], strides = [1, 1]} : vector<4x256xf32> to vector<4x255xf32>
    %98 = vector.extract_strided_slice %71 {offsets = [0, 0], sizes = [4, 1], strides = [1, 1]} : vector<4x256xf32> to vector<4x1xf32>
    %99 = tpu.concatenate %97, %98 in 1 : vector<4x255xf32>, vector<4x1xf32> -> vector<4x256xf32>
    %cst_41 = arith.constant 0.000000e+00 : f32
    %100 = vector.broadcast %cst_41 : f32 to vector<4x256xf32>
    %101 = arith.select %10, %99, %100 : vector<4x256xi1>, vector<4x256xf32>
    %c20_42 = arith.constant 20 : index
    %c0_43 = arith.constant 0 : index
    %102 = vector.load %arg5[%c20_42, %c0_43] : memref<36x256xf32, #tpu.memory_space<vmem>>, vector<4x256xf32>
    tpu.vector_store %arg5[%c20_42, %c0_43], %101 {strides = array<i32>} : memref<36x256xf32, #tpu.memory_space<vmem>>, vector<4x256xf32>,
    %103 = vector.extract_strided_slice %71 {offsets = [0, 15], sizes = [4, 241], strides = [1, 1]} : vector<4x256xf32> to vector<4x241xf32>
    %104 = vector.extract_strided_slice %71 {offsets = [0, 0], sizes = [4, 15], strides = [1, 1]} : vector<4x256xf32> to vector<4x15xf32>
    %105 = tpu.concatenate %103, %104 in 1 : vector<4x241xf32>, vector<4x15xf32> -> vector<4x256xf32>
    %cst_44 = arith.constant 0.000000e+00 : f32
    %106 = vector.broadcast %cst_44 : f32 to vector<4x256xf32>
    %107 = arith.select %13, %105, %106 : vector<4x256xi1>, vector<4x256xf32>
    %c24_45 = arith.constant 24 : index
    %c0_46 = arith.constant 0 : index
    %108 = vector.load %arg5[%c24_45, %c0_46] : memref<36x256xf32, #tpu.memory_space<vmem>>, vector<4x256xf32>
    tpu.vector_store %arg5[%c24_45, %c0_46], %107 {strides = array<i32>} : memref<36x256xf32, #tpu.memory_space<vmem>>, vector<4x256xf32>,
    %109 = vector.extract_strided_slice %71 {offsets = [0, 16], sizes = [4, 240], strides = [1, 1]} : vector<4x256xf32> to vector<4x240xf32>
    %110 = vector.extract_strided_slice %71 {offsets = [0, 0], sizes = [4, 16], strides = [1, 1]} : vector<4x256xf32> to vector<4x16xf32>
    %111 = tpu.concatenate %109, %110 in 1 : vector<4x240xf32>, vector<4x16xf32> -> vector<4x256xf32>
    %cst_47 = arith.constant 0.000000e+00 : f32
    %112 = vector.broadcast %cst_47 : f32 to vector<4x256xf32>
    %113 = arith.select %6, %111, %112 : vector<4x256xi1>, vector<4x256xf32>
    %c28_48 = arith.constant 28 : index
    %c0_49 = arith.constant 0 : index
    %114 = vector.load %arg5[%c28_48, %c0_49] : memref<36x256xf32, #tpu.memory_space<vmem>>, vector<4x256xf32>
    tpu.vector_store %arg5[%c28_48, %c0_49], %113 {strides = array<i32>} : memref<36x256xf32, #tpu.memory_space<vmem>>, vector<4x256xf32>,
    %115 = vector.extract_strided_slice %71 {offsets = [0, 17], sizes = [4, 239], strides = [1, 1]} : vector<4x256xf32> to vector<4x239xf32>
    %116 = vector.extract_strided_slice %71 {offsets = [0, 0], sizes = [4, 17], strides = [1, 1]} : vector<4x256xf32> to vector<4x17xf32>
    %117 = tpu.concatenate %115, %116 in 1 : vector<4x239xf32>, vector<4x17xf32> -> vector<4x256xf32>
    %cst_50 = arith.constant 0.000000e+00 : f32
    %118 = vector.broadcast %cst_50 : f32 to vector<4x256xf32>
    %119 = arith.select %14, %117, %118 : vector<4x256xi1>, vector<4x256xf32>
    %c32_51 = arith.constant 32 : index
    %c0_52 = arith.constant 0 : index
    %120 = vector.load %arg5[%c32_51, %c0_52] : memref<36x256xf32, #tpu.memory_space<vmem>>, vector<4x256xf32>
    tpu.vector_store %arg5[%c32_51, %c0_52], %119 {strides = array<i32>} : memref<36x256xf32, #tpu.memory_space<vmem>>, vector<4x256xf32>,
    %c0_53 = arith.constant 0 : index
    %c0_54 = arith.constant 0 : index
    %121 = vector.load %arg5[%c0_53, %c0_54] : memref<36x256xf32, #tpu.memory_space<vmem>>, vector<36x256xf32>
    %cst_55 = arith.constant dense<0.000000e+00> : vector<4x256xf32>
    %122 = tpu.matmul %16, %121, %cst_55 {dimension_numbers = #tpu.dot_dimension_numbers<[1], [0], [0], [1], [0, 0, 1, 1], [], []>} : vector<4x36xf32>, vector<36x256xf32>, vector<4x256xf32> -> vector<4x256xf32>
    %123 = arith.addf %18, %122 : vector<4x256xf32>
    %c0_56 = arith.constant 0 : index
    %c0_57 = arith.constant 0 : index
    %c0_58 = arith.constant 0 : index
    %124 = vector.load %arg4[%c0_56, %c0_57, %c0_58] : memref<1x4x256xf32, #tpu.memory_space<vmem>>, vector<1x4x256xf32>
    %125 = vector.shape_cast %124 : vector<1x4x256xf32> to vector<4x256xf32>
    %126 = vector.shape_cast %123 : vector<4x256xf32> to vector<1x4x256xf32>
    tpu.vector_store %arg4[%c0_56, %c0_57, %c0_58], %126 {strides = array<i32>} : memref<1x4x256xf32, #tpu.memory_space<vmem>>, vector<1x4x256xf32>,
    return
  }
  func.func @transform_0(%arg0: i32) -> (i32, i32, i32) {
    %c0_i32 = arith.constant 0 : i32
    %c0_i32_0 = arith.constant 0 : i32
    %c0_i32_1 = arith.constant 0 : i32
    return %arg0, %c0_i32, %c0_i32_0 : i32, i32, i32
  }
  func.func @transform_1(%arg0: i32) -> (i32, i32) {
    %c0_i32 = arith.constant 0 : i32
    %c0_i32_0 = arith.constant 0 : i32
    %c0_i32_1 = arith.constant 0 : i32
    return %c0_i32, %c0_i32_0 : i32, i32
  }
  func.func @transform_2(%arg0: i32) -> (i32, i32) {
    %c0_i32 = arith.constant 0 : i32
    %c0_i32_0 = arith.constant 0 : i32
    %c0_i32_1 = arith.constant 0 : i32
    return %c0_i32, %c0_i32_0 : i32, i32
  }
  func.func @transform_3(%arg0: i32) -> (i32, i32, i32) {
    %c0_i32 = arith.constant 0 : i32
    %c0_i32_0 = arith.constant 0 : i32
    %c0_i32_1 = arith.constant 0 : i32
    return %arg0, %c0_i32, %c0_i32_0 : i32, i32, i32
  }
}

</mosaic_0001>

<llo_original>
// kernel: tpu_custom_call.1
$region0: #{tpu_custom_call.1}
  #allocation0 [shape = 'u32[]', space=smem, size = 0x4, offset = 0x4, fixed_abs, tag = 'smem constant byte address 0x4 - core index']
  #allocation1 [shape = 'u32[144,128]{1,0:T(1,128)}', space=vmem, size = 0x12000, scoped, tag = 'internal scratch']
  #allocation2 [shape = 'f32[36,256]{1,0:T(8,128)}', space=vmem, size = 0xa000, scoped, tag = 'scratch operand']
  %s0 = inlined_call_operand.hbm [shape: f32[2,4,256], index: 0, kind: input, shape index: {}]
  %s1 = inlined_call_operand.hbm [shape: f32[4,36], index: 1, kind: input, shape index: {}]
  %s2 = inlined_call_operand.vmem [shape: f32[4,36], index: 2, kind: input, shape index: {}]
  %s3 = inlined_call_operand.hbm [shape: f32[2,4,256], index: 3, kind: output, shape index: {}]
  %s4 = sld [smem:[#allocation0]]
  $region53: #{tpu_custom_call.1} parent=0
    _
  %s6 = ssub.s32 1, %s4
  %s7 = scalar_select 0, %s6, %s4
  $region1: #{tpu_custom_call.1} parent=0
    #allocation3 [shape = 'u8[8192]{0}', space=vmem, size = 0x2000, scoped, tag = 'input window, operand 0']
    #allocation4 [shape = 's32[2]{0}', space=sflag, size = 0x8, scoped, tag = 'scoped memory for tpu_custom_call.1']
    #allocation5 [shape = 's32[2]{0}', space=sflag, size = 0x8, scoped, tag = 'scoped memory for tpu_custom_call.1']
    #allocation6 [shape = 'u8[2048]{0}', space=vmem, size = 0x800, scoped, tag = 'input window, operand 1, single buffered']
    #allocation7 [shape = 's32[1]{0}', space=sflag, size = 0x4, scoped, tag = 'scoped memory for tpu_custom_call.1']
    #allocation8 [shape = 'u8[8192]{0}', space=vmem, size = 0x2000, scoped, tag = 'output window, operand 0']
    %8 = vsyncpa [#allocation4], 0
    %s9 = scalar_lea.sflag [#allocation4], 1
    %10 = vsyncpa %s9, 0
    %11 = vsyncpa [#allocation7], 0
    %12 = vsyncpa [#allocation5], 0
    %s13 = scalar_lea.sflag [#allocation5], 1
    %14 = vsyncpa %s13, 0
    loop: start=0, step=1, limit=4
    $region2: #{tpu_custom_call.1} parent=1 // loop_pre_header
      _
    $region3: #{tpu_custom_call.1} parent=1 // loop_header
      %s16 = sphi 0, %s20
      %p17 = scmp.ge.s32.totalorder %s16, 4
      %s26 = sphi 0, %s28
      %s29 = sphi 0, %s26
      %s30 = sphi 0, %s29
      %s46 = sphi 0, %s30
      %s50 = sphi 0, %s50
      %s52 = sphi 0, %s50
      %s53 = sphi 0, %s52
      %s67 = sphi 0, %s53
      %s71 = sphi 0, %s71
      %s73 = sphi 0, %s71
      %s74 = sphi 0, %s73
      %s88 = sphi 0, %s74
      %s94 = sphi 0, %s96
      %s97 = sphi 0, %s94
      %s98 = sphi 0, %s97
      %s114 = sphi 0, %s98
    $region4: #{tpu_custom_call.1} parent=1 // loop_header_branch
      %19 = sbr.rel (%p17) target = $region8
    $region5: #{tpu_custom_call.1} parent=1 // loop_body
      %s21 = ssub.s32 %s16, 1
      %s22 = ssub.s32 %s16, 2
      %s23 = sadd.s32 %s16, 1
      %s24 = ssub.s32 %s16, %s23
      %p25 = scmp.eq.s32.totalorder %s24, 0
      %s27 = sadd.s32 %s26, 1
      %s28 = scalar_select %p25, %s26, %s27
      %p31 = pneg %p25
      %p32 = scmp.eq.s32.totalorder %s16, 1
      %p33 = por %p31, %p32
      %p34 = scmp.ne.s32.totalorder %s26, %s29
      %p35 = scmp.eq.s32.totalorder %s16, 0
      %p36 = por %p34, %p35
      %p37 = scmp.ne.s32.totalorder %s26, %s29
      %p38 = scmp.eq.s32.totalorder %s21, 1
      %p39 = por %p37, %p38
      %p40 = scmp.ne.s32.totalorder %s29, %s30
      %p41 = scmp.eq.s32.totalorder %s21, 0
      %p42 = por %p40, %p41
      %p43 = scmp.ne.s32.totalorder %s29, %s30
      %p44 = scmp.eq.s32.totalorder %s22, 1
      %p45 = por %p43, %p44
      %p47 = scmp.ne.s32.totalorder %s30, %s46
      %p48 = scmp.eq.s32.totalorder %s22, 0
      %p49 = por %p47, %p48
      %s51 = sadd.s32 %s50, 1
      %p54 = scmp.eq.s32.totalorder %s16, 1
      %p55 = scmp.ne.s32.totalorder %s50, %s52
      %p56 = scmp.eq.s32.totalorder %s16, 0
      %p57 = por %p55, %p56
      %p58 = scmp.ne.s32.totalorder %s50, %s52
      %p59 = scmp.eq.s32.totalorder %s21, 1
      %p60 = por %p58, %p59
      %p61 = scmp.ne.s32.totalorder %s52, %s53
      %p62 = scmp.eq.s32.totalorder %s21, 0
      %p63 = por %p61, %p62
      %p64 = scmp.ne.s32.totalorder %s52, %s53
      %p65 = scmp.eq.s32.totalorder %s22, 1
      %p66 = por %p64, %p65
      %p68 = scmp.ne.s32.totalorder %s53, %s67
      %p69 = scmp.eq.s32.totalorder %s22, 0
      %p70 = por %p68, %p69
      %s72 = sadd.s32 %s71, 1
      %p75 = scmp.eq.s32.totalorder %s16, 1
      %p76 = scmp.ne.s32.totalorder %s71, %s73
      %p77 = scmp.eq.s32.totalorder %s16, 0
      %p78 = por %p76, %p77
      %p79 = scmp.ne.s32.totalorder %s71, %s73
      %p80 = scmp.eq.s32.totalorder %s21, 1
      %p81 = por %p79, %p80
      %p82 = scmp.ne.s32.totalorder %s73, %s74
      %p83 = scmp.eq.s32.totalorder %s21, 0
      %p84 = por %p82, %p83
      %p85 = scmp.ne.s32.totalorder %s73, %s74
      %p86 = scmp.eq.s32.totalorder %s22, 1
      %p87 = por %p85, %p86
      %p89 = scmp.ne.s32.totalorder %s74, %s88
      %p90 = scmp.eq.s32.totalorder %s22, 0
      %p91 = por %p89, %p90
      %s92 = ssub.s32 %s16, %s23
      %p93 = scmp.eq.s32.totalorder %s92, 0
      %s95 = sadd.s32 %s94, 1
      %s96 = scalar_select %p93, %s94, %s95
      %p99 = pneg %p93
      %p100 = scmp.eq.s32.totalorder %s16, 1
      %p101 = por %p99, %p100
      %p102 = scmp.ne.s32.totalorder %s94, %s97
      %p103 = scmp.eq.s32.totalorder %s16, 0
      %p104 = por %p102, %p103
      %p105 = scmp.ne.s32.totalorder %s94, %s97
      %p106 = scmp.eq.s32.totalorder %s21, 1
      %p107 = por %p105, %p106
      %p108 = scmp.ne.s32.totalorder %s97, %s98
      %p109 = scmp.eq.s32.totalorder %s21, 0
      %p110 = por %p108, %p109
      %p111 = scmp.ne.s32.totalorder %s97, %s98
      %p112 = scmp.eq.s32.totalorder %s22, 1
      %p113 = por %p111, %p112
      %p115 = scmp.ne.s32.totalorder %s98, %s114
      %p116 = scmp.eq.s32.totalorder %s22, 0
      %p117 = por %p115, %p116
      %p118 = scmp.le.s32.totalorder 1, %s16
      %p119 = scmp.lt.s32.totalorder %s16, 3
      %p120 = pnand %p118, %p119
      %p121 = pneg %p120
      // Predicated region
      $region9: #{tpu_custom_call.1} parent=5 // pred_check
        _
      $region10: #{tpu_custom_call.1} parent=5 // pred_check_branch
        %123 = sbr.rel (%p120) target = $region12
      $region11: #{tpu_custom_call.1} parent=5 // pred_region
        %s124 = ssub.s32 %s16, 1
        // Predicated region
        $region13: #{tpu_custom_call.1} parent=11 // pred_check
          %p125 = pneg %p63
        $region14: #{tpu_custom_call.1} parent=11 // pred_check_branch
          %127 = sbr.rel (%p125) target = $region16
        $region15: #{tpu_custom_call.1} parent=11 // pred_region
          %s129 = ssub.s32 64, 64
          %130 = vsyncadd [#allocation7], %s129
          %s132 = sshll.u32 [#allocation6], 4
          %s133 = int_to_ptr.vmem [resolvable:$true] %s132
          %135 = dma.hbm_to_vmem [thread:$0]  %s1, 64, %s133, [#allocation7]
        $region16: #{tpu_custom_call.1} parent=11 // pred_fallthru
          _
        // Predicated region
        $region17: #{tpu_custom_call.1} parent=11 // pred_check
          %p136 = pneg %p84
        $region18: #{tpu_custom_call.1} parent=11 // pred_check_branch
          %138 = sbr.rel (%p136) target = $region20
        $region19: #{tpu_custom_call.1} parent=11 // pred_region
          _
        $region20: #{tpu_custom_call.1} parent=11 // pred_fallthru
          _
      $region12: #{tpu_custom_call.1} parent=5 // pred_fallthru
        _
      %p139 = scmp.lt.s32.totalorder %s16, 2
      // Predicated region
      $region21: #{tpu_custom_call.1} parent=5 // pred_check
        %p140 = pneg %p139
      $region22: #{tpu_custom_call.1} parent=5 // pred_check_branch
        %142 = sbr.rel (%p140) target = $region24
      $region23: #{tpu_custom_call.1} parent=5 // pred_region
        // Predicated region
        $region25: #{tpu_custom_call.1} parent=23 // pred_check
          %p143 = pneg %p36
        $region26: #{tpu_custom_call.1} parent=23 // pred_check_branch
          %145 = sbr.rel (%p143) target = $region28
        $region27: #{tpu_custom_call.1} parent=23 // pred_region
          %s146 = sand.u32 %s26, 1
          %s147 = scalar_lea.sflag [#allocation4], %s146
          %s148 = sand.u32 %s26, 1
          %s149 = smul.addr %s148, 8
          %s150 = scalar_lea.vmem [#allocation3], %s149
          %s152 = ssub.s32 128, 128
          %153 = vsyncadd %s147, %s152
          %s154 = smul.addr %s16, 2
          %s155 = smul.addr %s154, 64
          %s156 = scalar_lea.hbm %s0, %s155
          %s158 = sshll.u32 %s150, 4
          %s159 = int_to_ptr.vmem [resolvable:$true] %s158
          %161 = dma.hbm_to_vmem [thread:$0]  %s156, 128, %s159, %s147
        $region28: #{tpu_custom_call.1} parent=23 // pred_fallthru
          _
      $region24: #{tpu_custom_call.1} parent=5 // pred_fallthru
        _
      %p162 = scmp.le.s32.totalorder 1, %s16
      %p163 = scmp.lt.s32.totalorder %s16, 3
      %p164 = pnand %p162, %p163
      %p165 = pneg %p164
      // Predicated region
      $region29: #{tpu_custom_call.1} parent=5 // pred_check
        _
      $region30: #{tpu_custom_call.1} parent=5 // pred_check_branch
        %167 = sbr.rel (%p164) target = $region32
      $region31: #{tpu_custom_call.1} parent=5 // pred_region
        %s168 = ssub.s32 %s16, 1
        %s169 = sand.u32 %s29, 1
        %s170 = scalar_lea.sflag [#allocation4], %s169
        %s171 = sand.u32 %s29, 1
        %s172 = smul.addr %s171, 8
        %s173 = scalar_lea.vmem [#allocation3], %s172
        // Predicated region
        $region33: #{tpu_custom_call.1} parent=31 // pred_check
          %p174 = pneg %p42
        $region34: #{tpu_custom_call.1} parent=31 // pred_check_branch
          %176 = sbr.rel (%p174) target = $region36
        $region35: #{tpu_custom_call.1} parent=31 // pred_region
          %177 = dma.done %s170, 128
        $region36: #{tpu_custom_call.1} parent=31 // pred_fallthru
          _
        // Predicated region
        $region37: #{tpu_custom_call.1} parent=31 // pred_check
          %p178 = pneg %p63
        $region38: #{tpu_custom_call.1} parent=31 // pred_check_branch
          %180 = sbr.rel (%p178) target = $region40
        $region39: #{tpu_custom_call.1} parent=31 // pred_region
          %181 = dma.done [#allocation7], 64
        $region40: #{tpu_custom_call.1} parent=31 // pred_fallthru
          _
        %s182 = sand.u32 %s29, 1
        %s183 = scalar_lea.sflag [#allocation4], %s182
        %s184 = sand.u32 %s29, 1
        %s185 = smul.addr %s184, 8
        %s186 = scalar_lea.vmem [#allocation3], %s185
        %p187 = pneg %p42
        %p188 = pneg %p39
        %p189 = pneg %p63
        %p190 = pneg %p60
        %p191 = pneg %p84
        %p192 = pneg %p81
        %p193 = pneg %p110
        %p194 = pneg %p107
        %s195 = sand.u32 %s97, 1
        %s196 = scalar_lea.sflag [#allocation5], %s195
        %s197 = sand.u32 %s97, 1
        %s198 = smul.addr %s197, 8
        %s199 = scalar_lea.vmem [#allocation8], %s198
        %v200 = vlaneseq
        %v201 = vand.u32 %v200, 127
        %v202 = vadd.s32 %v201, 128
        %v203 = vand.u32 %v201, 15
        %v204 = vand.u32 %v202, 15
        %vm205 = vcmp.ge.s32.totalorder %v201, 16
        %vm206 = vcmp.ge.s32.totalorder %v202, 16
        %vm207 = vcmp.lt.s32.totalorder %v201, 240
        %vm208 = vcmp.lt.s32.totalorder %v202, 240
        %vm209 = vcmp.ge.s32.totalorder %v203, 1
        %vm210 = vcmp.ge.s32.totalorder %v204, 1
        %vm211 = vcmp.le.s32.totalorder %v203, 14
        %vm212 = vcmp.le.s32.totalorder %v204, 14
        %vm213 = vmand %vm205, %vm209
        %vm214 = vmand %vm206, %vm210
        %vm215 = vmand %vm205, %vm211
        %vm216 = vmand %vm206, %vm212
        %vm217 = vmand %vm207, %vm209
        %vm218 = vmand %vm208, %vm210
        %vm219 = vmand %vm207, %vm211
        %vm220 = vmand %vm208, %vm212
        %v221 = vld [vmem:[#allocation6] sm:$0xf]
        %v222 = vld [vmem:[%s2] sm:$0xf]
        %v223 = vld [vmem:[%s173] sm:$0xff]
        %v225 = vcombine.high %v223, %v223
        %226 = vrot.lane.b32.xlu0 %v225, 17
        %v227 = vpop.permute.xlu0 %226
        %229 = vrot.lane.b32.xlu0 %v223, 17
        %v230 = vpop.permute.xlu0 %229
        %vm231 = vcmask 138240
        %v232 = vsel %vm231, %v230, %v227
        %v235 = vsel %vm231, %v227, %v230
        %v236 = vsel %vm213, %v235, 0.0
        %v237 = vsel %vm214, %v232, 0.0
        %238 = vst [vmem:[#allocation2] sm:$0xf] %v236
        %239 = vst [vmem:[#allocation2 + $0x8] sm:$0xf] %v237
        %240 = vrot.lane.b32.xlu0 %v225, 16
        %v241 = vpop.permute.xlu0 %240
        %243 = vrot.lane.b32.xlu0 %v223, 16
        %v244 = vpop.permute.xlu0 %243
        %vm245 = vcmask 130048
        %v246 = vsel %vm245, %v244, %v241
        %v249 = vsel %vm245, %v241, %v244
        %v250 = vsel %vm205, %v249, 0.0
        %v251 = vsel %vm206, %v246, 0.0
        %v254 = vrot.slane %v250, 4
        %v255 = vrot.slane %v251, 4
        %258 = vst [vmem:[#allocation2] sm:$0xf0] %v254
        %259 = vst [vmem:[#allocation2 + $0x8] sm:$0xf0] %v255
        %260 = vrot.lane.b32.xlu0 %v225, 15
        %v261 = vpop.permute.xlu0 %260
        %263 = vrot.lane.b32.xlu0 %v223, 15
        %v264 = vpop.permute.xlu0 %263
        %vm265 = vcmask 121856
        %v266 = vsel %vm265, %v264, %v261
        %v269 = vsel %vm265, %v261, %v264
        %v270 = vsel %vm215, %v269, 0.0
        %v271 = vsel %vm216, %v266, 0.0
        %272 = vst [vmem:[#allocation2 + $0x10] sm:$0xf] %v270
        %273 = vst [vmem:[#allocation2 + $0x18] sm:$0xf] %v271
        %274 = vrot.lane.b32.xlu0 %v225, 1
        %v275 = vpop.permute.xlu0 %274
        %277 = vrot.lane.b32.xlu0 %v223, 1
        %v278 = vpop.permute.xlu0 %277
        %vm279 = vcmask 7168
        %v280 = vsel %vm279, %v278, %v275
        %v283 = vsel %vm279, %v275, %v278
        %v284 = vsel %vm209, %v283, 0.0
        %v285 = vsel %vm210, %v280, 0.0
        %v288 = vrot.slane %v284, 4
        %v289 = vrot.slane %v285, 4
        %292 = vst [vmem:[#allocation2 + $0x10] sm:$0xf0] %v288
        %293 = vst [vmem:[#allocation2 + $0x18] sm:$0xf0] %v289
        %295 = vst [vmem:[#allocation2 + $0x20] sm:$0xf] %v223
        %296 = vst [vmem:[#allocation2 + $0x28] sm:$0xf] %v225
        %297 = vrot.lane.b32.xlu0 %v223, 127
        %v298 = vpop.permute.xlu0 %297
        %299 = vrot.lane.b32.xlu0 %v225, 127
        %v300 = vpop.permute.xlu0 %299
        %vm301 = vcmask 1039360
        %v302 = vsel %vm301, %v298, %v300
        %v306 = vsel %vm301, %v300, %v298
        %v307 = vsel %vm211, %v302, 0.0
        %v308 = vsel %vm212, %v306, 0.0
        %v311 = vrot.slane %v307, 4
        %v312 = vrot.slane %v308, 4
        %315 = vst [vmem:[#allocation2 + $0x20] sm:$0xf0] %v311
        %316 = vst [vmem:[#allocation2 + $0x28] sm:$0xf0] %v312
        %317 = vrot.lane.b32.xlu0 %v223, 113
        %v318 = vpop.permute.xlu0 %317
        %319 = vrot.lane.b32.xlu0 %v225, 113
        %v320 = vpop.permute.xlu0 %319
        %vm321 = vcmask 924672
        %v322 = vsel %vm321, %v318, %v320
        %v326 = vsel %vm321, %v320, %v318
        %v327 = vsel %vm217, %v322, 0.0
        %v328 = vsel %vm218, %v326, 0.0
        %329 = vst [vmem:[#allocation2 + $0x30] sm:$0xf] %v327
        %330 = vst [vmem:[#allocation2 + $0x38] sm:$0xf] %v328
        %331 = vrot.lane.b32.xlu0 %v223, 112
        %v332 = vpop.permute.xlu0 %331
        %333 = vrot.lane.b32.xlu0 %v225, 112
        %v334 = vpop.permute.xlu0 %333
        %vm335 = vcmask 916480
        %v336 = vsel %vm335, %v332, %v334
        %v340 = vsel %vm335, %v334, %v332
        %v341 = vsel %vm207, %v336, 0.0
        %v342 = vsel %vm208, %v340, 0.0
        %v345 = vrot.slane %v341, 4
        %v346 = vrot.slane %v342, 4
        %349 = vst [vmem:[#allocation2 + $0x30] sm:$0xf0] %v345
        %350 = vst [vmem:[#allocation2 + $0x38] sm:$0xf0] %v346
        %351 = vrot.lane.b32.xlu0 %v223, 111
        %v352 = vpop.permute.xlu0 %351
        %353 = vrot.lane.b32.xlu0 %v225, 111
        %v354 = vpop.permute.xlu0 %353
        %vm355 = vcmask 908288
        %v356 = vsel %vm355, %v352, %v354
        %v360 = vsel %vm355, %v354, %v352
        %v361 = vsel %vm219, %v356, 0.0
        %v362 = vsel %vm220, %v360, 0.0
        %363 = vst [vmem:[#allocation2 + $0x40] sm:$0xf] %v361
        %364 = vst [vmem:[#allocation2 + $0x48] sm:$0xf] %v362
        %v365 = vld [vmem:[#allocation2] sm:$0xff]
        %v366 = vld [vmem:[#allocation2 + $0x8] sm:$0xff]
        %v367 = vld [vmem:[#allocation2 + $0x10] sm:$0xff]
        %v368 = vld [vmem:[#allocation2 + $0x18] sm:$0xff]
        %v369 = vld [vmem:[#allocation2 + $0x20] sm:$0xff]
        %v370 = vld [vmem:[#allocation2 + $0x28] sm:$0xff]
        %v371 = vld [vmem:[#allocation2 + $0x30] sm:$0xff]
        %v372 = vld [vmem:[#allocation2 + $0x38] sm:$0xff]
        %v373 = vld [vmem:[#allocation2 + $0x40] sm:$0xf]
        %v374 = vld [vmem:[#allocation2 + $0x48] sm:$0xf]
        %vm375 = vcmask 293888
        %v377 = vsel %vm375, %v221, 0
        %vm379 = vcmask 1043456
        %v381 = vsel %vm379, %v373, 0
        %v384 = vsel %vm379, %v374, 0
        %386 = vmatprep.subr.mxu0 %v366
        %387 = vmatpush1.msra.mxu0 %v365
        %388 = vmatprep.subr.mxu0 %v368
        %389 = vmatpush1.msra.mxu0 %v367
        %390 = vmatprep.subr.mxu0 %v370
        %391 = vmatpush1.msra.mxu0 %v369
        %392 = vmatprep.subr.mxu0 %v372
        %393 = vmatpush1.msra.mxu0 %v371
        %394 = vmatprep.subr.mxu0 %v384
        %395 = vmatpush1.msra.mxu0 %v381
        %396 = vmatprep.subr.mxu0 0.0
        %397 = vmatpush1.msra.mxu0 0.0
        %398 = vmatprep.subr.mxu0 0.0
        %399 = vmatpush1.msra.mxu0 0.0
        %400 = vmatprep.subr.mxu0 0.0
        %401 = vmatpush1.msra.mxu0 0.0
        %402 = vmatprep.subr.mxu0 0.0
        %403 = vmatpush1.msra.mxu0 0.0
        %404 = vmatprep.subr.mxu0 0.0
        %405 = vmatpush1.msra.mxu0 0.0
        %406 = vmatprep.subr.mxu0 0.0
        %407 = vmatpush1.msra.mxu0 0.0
        %408 = vmatprep.subr.mxu0 0.0
        %409 = vmatpush1.msra.mxu0 0.0
        %410 = vmatprep.subr.mxu0 0.0
        %411 = vmatpush1.msra.mxu0 0.0
        %412 = vmatprep.subr.mxu0 0.0
        %413 = vmatpush1.msra.mxu0 0.0
        %414 = vmatprep.subr.mxu0 0.0
        %415 = vmatpush1.msra.mxu0 0.0
        %416 = vmatprep.subr.mxu0 0.0
        %417 = vmatpush1.msra.mxu0 0.0
        %418 = vmatprep.subr.mxu0 0.0
        %419 = vmatpush1.msra.mxu0 0.0
        %420 = vmatprep.subr.mxu0 0.0
        %421 = vmatpush1.msra.mxu0 0.0
        %422 = vmatprep.subr.mxu0 0.0
        %423 = vmatpush1.msra.mxu0 0.0
        %424 = vmatprep.subr.mxu0 0.0
        %425 = vmatpush1.msra.mxu0 0.0
        %426 = vmatprep.subr.mxu0 0.0
        %427 = vmatpush1.msra.mxu0 0.0
        %428 = vmatprep.subr.mxu0 0.0
        %429 = vmatpush1.msra.mxu0 0.0
        %430 = vmatprep.subr.mxu0 0.0
        %431 = vmatpush1.msra.mxu0 0.0
        %432 = vmatprep.subr.mxu0 0.0
        %433 = vmatpush1.msra.mxu0 0.0
        %434 = vmatprep.subr.mxu0 0.0
        %435 = vmatpush1.msra.mxu0 0.0
        %436 = vmatprep.subr.mxu0 0.0
        %437 = vmatpush1.msra.mxu0 0.0
        %438 = vmatprep.subr.mxu0 0.0
        %439 = vmatpush1.msra.mxu0 0.0
        %440 = vmatprep.subr.mxu0 0.0
        %441 = vmatpush1.msra.mxu0 0.0
        %442 = vmatprep.subr.mxu0 0.0
        %443 = vmatpush1.msra.mxu0 0.0
        %444 = vmatprep.subr.mxu0 0.0
        %445 = vmatpush1.msra.mxu0 0.0
        %446 = vmatprep.subr.mxu0 0.0
        %447 = vmatpush1.msra.mxu0 0.0
        %448 = vmatprep.subr.mxu0 0.0
        %449 = vmatpush1.msra.mxu0 0.0
        %450 = vmatprep.mubr.f32.mxu0 0.0
        %451 = vmatmul.mubr.f32.gmra.mrb[0].mxu0 %v377
        %v452 = vpop.f32.mrb[0].mxu0
        %v453 = vadd.f32 0.0, %v452
        %v454 = vpop.f32.mrb[0].mxu0
        %v455 = vadd.f32 0.0, %v454
        %456 = vdwg.mxu0
        %v457 = vmax.f32 %v453, 0.0
        %v458 = vmax.f32 %v455, 0.0
        %460 = vrot.lane.b32.xlu0 %v458, 17
        %v461 = vpop.permute.xlu0 %460
        %464 = vrot.lane.b32.xlu0 %v457, 17
        %v465 = vpop.permute.xlu0 %464
        %v466 = vsel %vm231, %v465, %v461
        %v469 = vsel %vm231, %v461, %v465
        %v470 = vsel %vm213, %v469, 0.0
        %v471 = vsel %vm214, %v466, 0.0
        %472 = vst [vmem:[#allocation2] sm:$0xf] %v470
        %473 = vst [vmem:[#allocation2 + $0x8] sm:$0xf] %v471
        %474 = vrot.lane.b32.xlu0 %v458, 16
        %v475 = vpop.permute.xlu0 %474
        %477 = vrot.lane.b32.xlu0 %v457, 16
        %v478 = vpop.permute.xlu0 %477
        %v479 = vsel %vm245, %v478, %v475
        %v482 = vsel %vm245, %v475, %v478
        %v483 = vsel %vm205, %v482, 0.0
        %v484 = vsel %vm206, %v479, 0.0
        %v487 = vrot.slane %v483, 4
        %v488 = vrot.slane %v484, 4
        %491 = vst [vmem:[#allocation2] sm:$0xf0] %v487
        %492 = vst [vmem:[#allocation2 + $0x8] sm:$0xf0] %v488
        %493 = vrot.lane.b32.xlu0 %v458, 15
        %v494 = vpop.permute.xlu0 %493
        %496 = vrot.lane.b32.xlu0 %v457, 15
        %v497 = vpop.permute.xlu0 %496
        %v498 = vsel %vm265, %v497, %v494
        %v501 = vsel %vm265, %v494, %v497
        %v502 = vsel %vm215, %v501, 0.0
        %v503 = vsel %vm216, %v498, 0.0
        %504 = vst [vmem:[#allocation2 + $0x10] sm:$0xf] %v502
        %505 = vst [vmem:[#allocation2 + $0x18] sm:$0xf] %v503
        %506 = vrot.lane.b32.xlu0 %v458, 1
        %v507 = vpop.permute.xlu0 %506
        %509 = vrot.lane.b32.xlu0 %v457, 1
        %v510 = vpop.permute.xlu0 %509
        %v511 = vsel %vm279, %v510, %v507
        %v514 = vsel %vm279, %v507, %v510
        %v515 = vsel %vm209, %v514, 0.0
        %v516 = vsel %vm210, %v511, 0.0
        %v519 = vrot.slane %v515, 4
        %v520 = vrot.slane %v516, 4
        %523 = vst [vmem:[#allocation2 + $0x10] sm:$0xf0] %v519
        %524 = vst [vmem:[#allocation2 + $0x18] sm:$0xf0] %v520
        %525 = vst [vmem:[#allocation2 + $0x20] sm:$0xf] %v457
        %526 = vst [vmem:[#allocation2 + $0x28] sm:$0xf] %v458
        %527 = vrot.lane.b32.xlu0 %v457, 127
        %v528 = vpop.permute.xlu0 %527
        %529 = vrot.lane.b32.xlu0 %v458, 127
        %v530 = vpop.permute.xlu0 %529
        %v531 = vsel %vm301, %v528, %v530
        %v535 = vsel %vm301, %v530, %v528
        %v536 = vsel %vm211, %v531, 0.0
        %v537 = vsel %vm212, %v535, 0.0
        %v540 = vrot.slane %v536, 4
        %v541 = vrot.slane %v537, 4
        %544 = vst [vmem:[#allocation2 + $0x20] sm:$0xf0] %v540
        %545 = vst [vmem:[#allocation2 + $0x28] sm:$0xf0] %v541
        %546 = vrot.lane.b32.xlu0 %v457, 113
        %v547 = vpop.permute.xlu0 %546
        %548 = vrot.lane.b32.xlu0 %v458, 113
        %v549 = vpop.permute.xlu0 %548
        %v550 = vsel %vm321, %v547, %v549
        %v554 = vsel %vm321, %v549, %v547
        %v555 = vsel %vm217, %v550, 0.0
        %v556 = vsel %vm218, %v554, 0.0
        %557 = vst [vmem:[#allocation2 + $0x30] sm:$0xf] %v555
        %558 = vst [vmem:[#allocation2 + $0x38] sm:$0xf] %v556
        %559 = vrot.lane.b32.xlu0 %v457, 112
        %v560 = vpop.permute.xlu0 %559
        %561 = vrot.lane.b32.xlu0 %v458, 112
        %v562 = vpop.permute.xlu0 %561
        %v563 = vsel %vm335, %v560, %v562
        %v567 = vsel %vm335, %v562, %v560
        %v568 = vsel %vm207, %v563, 0.0
        %v569 = vsel %vm208, %v567, 0.0
        %v572 = vrot.slane %v568, 4
        %v573 = vrot.slane %v569, 4
        %576 = vst [vmem:[#allocation2 + $0x30] sm:$0xf0] %v572
        %577 = vst [vmem:[#allocation2 + $0x38] sm:$0xf0] %v573
        %578 = vrot.lane.b32.xlu0 %v457, 111
        %v579 = vpop.permute.xlu0 %578
        %580 = vrot.lane.b32.xlu0 %v458, 111
        %v581 = vpop.permute.xlu0 %580
        %v582 = vsel %vm355, %v579, %v581
        %v586 = vsel %vm355, %v581, %v579
        %v587 = vsel %vm219, %v582, 0.0
        %v588 = vsel %vm220, %v586, 0.0
        %589 = vst [vmem:[#allocation2 + $0x40] sm:$0xf] %v587
        %590 = vst [vmem:[#allocation2 + $0x48] sm:$0xf] %v588
        %v591 = vld [vmem:[#allocation2] sm:$0xff]
        %v592 = vld [vmem:[#allocation2 + $0x8] sm:$0xff]
        %v593 = vld [vmem:[#allocation2 + $0x10] sm:$0xff]
        %v594 = vld [vmem:[#allocation2 + $0x18] sm:$0xff]
        %v595 = vld [vmem:[#allocation2 + $0x20] sm:$0xff]
        %v596 = vld [vmem:[#allocation2 + $0x28] sm:$0xff]
        %v597 = vld [vmem:[#allocation2 + $0x30] sm:$0xff]
        %v598 = vld [vmem:[#allocation2 + $0x38] sm:$0xff]
        %v599 = vld [vmem:[#allocation2 + $0x40] sm:$0xf]
        %v600 = vld [vmem:[#allocation2 + $0x48] sm:$0xf]
        %v602 = vsel %vm375, %v222, 0
        %v605 = vsel %vm379, %v599, 0
        %v608 = vsel %vm379, %v600, 0
        %610 = vmatprep.subr.mxu0 %v592
        %611 = vmatpush1.msra.mxu0 %v591
        %612 = vmatprep.subr.mxu0 %v594
        %613 = vmatpush1.msra.mxu0 %v593
        %614 = vmatprep.subr.mxu0 %v596
        %615 = vmatpush1.msra.mxu0 %v595
        %616 = vmatprep.subr.mxu0 %v598
        %617 = vmatpush1.msra.mxu0 %v597
        %618 = vmatprep.subr.mxu0 %v608
        %619 = vmatpush1.msra.mxu0 %v605
        %620 = vmatprep.subr.mxu0 0.0
        %621 = vmatpush1.msra.mxu0 0.0
        %622 = vmatprep.subr.mxu0 0.0
        %623 = vmatpush1.msra.mxu0 0.0
        %624 = vmatprep.subr.mxu0 0.0
        %625 = vmatpush1.msra.mxu0 0.0
        %626 = vmatprep.subr.mxu0 0.0
        %627 = vmatpush1.msra.mxu0 0.0
        %628 = vmatprep.subr.mxu0 0.0
        %629 = vmatpush1.msra.mxu0 0.0
        %630 = vmatprep.subr.mxu0 0.0
        %631 = vmatpush1.msra.mxu0 0.0
        %632 = vmatprep.subr.mxu0 0.0
        %633 = vmatpush1.msra.mxu0 0.0
        %634 = vmatprep.subr.mxu0 0.0
        %635 = vmatpush1.msra.mxu0 0.0
        %636 = vmatprep.subr.mxu0 0.0
        %637 = vmatpush1.msra.mxu0 0.0
        %638 = vmatprep.subr.mxu0 0.0
        %639 = vmatpush1.msra.mxu0 0.0
        %640 = vmatprep.subr.mxu0 0.0
        %641 = vmatpush1.msra.mxu0 0.0
        %642 = vmatprep.subr.mxu0 0.0
        %643 = vmatpush1.msra.mxu0 0.0
        %644 = vmatprep.subr.mxu0 0.0
        %645 = vmatpush1.msra.mxu0 0.0
        %646 = vmatprep.subr.mxu0 0.0
        %647 = vmatpush1.msra.mxu0 0.0
        %648 = vmatprep.subr.mxu0 0.0
        %649 = vmatpush1.msra.mxu0 0.0
        %650 = vmatprep.subr.mxu0 0.0
        %651 = vmatpush1.msra.mxu0 0.0
        %652 = vmatprep.subr.mxu0 0.0
        %653 = vmatpush1.msra.mxu0 0.0
        %654 = vmatprep.subr.mxu0 0.0
        %655 = vmatpush1.msra.mxu0 0.0
        %656 = vmatprep.subr.mxu0 0.0
        %657 = vmatpush1.msra.mxu0 0.0
        %658 = vmatprep.subr.mxu0 0.0
        %659 = vmatpush1.msra.mxu0 0.0
        %660 = vmatprep.subr.mxu0 0.0
        %661 = vmatpush1.msra.mxu0 0.0
        %662 = vmatprep.subr.mxu0 0.0
        %663 = vmatpush1.msra.mxu0 0.0
        %664 = vmatprep.subr.mxu0 0.0
        %665 = vmatpush1.msra.mxu0 0.0
        %666 = vmatprep.subr.mxu0 0.0
        %667 = vmatpush1.msra.mxu0 0.0
        %668 = vmatprep.subr.mxu0 0.0
        %669 = vmatpush1.msra.mxu0 0.0
        %670 = vmatprep.subr.mxu0 0.0
        %671 = vmatpush1.msra.mxu0 0.0
        %672 = vmatprep.subr.mxu0 0.0
        %673 = vmatpush1.msra.mxu0 0.0
        %674 = vmatprep.mubr.f32.mxu0 0.0
        %675 = vmatmul.mubr.f32.gmra.mrb[0].mxu0 %v602
        %v676 = vpop.f32.mrb[0].mxu0
        %v677 = vadd.f32 0.0, %v676
        %v678 = vpop.f32.mrb[0].mxu0
        %v679 = vadd.f32 0.0, %v678
        %680 = vdwg.mxu0
        %v683 = vcombine.low %v677, %v679
        %v685 = vadd.f32 %v223, %v683
        %686 = vst [vmem:[%s199] sm:$0xff] %v685
        %s687 = sand.u32 %s97, 1
        %s688 = scalar_lea.sflag [#allocation5], %s687
        %s689 = sand.u32 %s97, 1
        %s690 = smul.addr %s689, 8
        %s691 = scalar_lea.vmem [#allocation8], %s690
        // Predicated region
        $region41: #{tpu_custom_call.1} parent=31 // pred_check
          %p692 = pneg %p107
        $region42: #{tpu_custom_call.1} parent=31 // pred_check_branch
          %694 = sbr.rel (%p692) target = $region44
        $region43: #{tpu_custom_call.1} parent=31 // pred_region
          %s696 = ssub.s32 128, 128
          %697 = vsyncadd %s688, %s696
          %s698 = smul.addr %s21, 2
          %s699 = smul.addr %s698, 64
          %s700 = scalar_lea.hbm %s3, %s699
          %s702 = sshll.u32 %s691, 4
          %s703 = int_to_ptr.vmem [resolvable:$true] %s702
          %705 = dma.vmem_to_hbm [thread:$0]  %s703, 128, %s700, %s688
        $region44: #{tpu_custom_call.1} parent=31 // pred_fallthru
          _
      $region32: #{tpu_custom_call.1} parent=5 // pred_fallthru
        _
      %p706 = scmp.le.s32.totalorder 2, %s16
      // Predicated region
      $region45: #{tpu_custom_call.1} parent=5 // pred_check
        %p707 = pneg %p706
      $region46: #{tpu_custom_call.1} parent=5 // pred_check_branch
        %709 = sbr.rel (%p707) target = $region48
      $region47: #{tpu_custom_call.1} parent=5 // pred_region
        %s710 = ssub.s32 %s16, 2
        // Predicated region
        $region49: #{tpu_custom_call.1} parent=47 // pred_check
          %p711 = pneg %p113
        $region50: #{tpu_custom_call.1} parent=47 // pred_check_branch
          %713 = sbr.rel (%p711) target = $region52
        $region51: #{tpu_custom_call.1} parent=47 // pred_region
          %s714 = sand.u32 %s98, 1
          %s715 = scalar_lea.sflag [#allocation5], %s714
          %s716 = sand.u32 %s98, 1
          %s717 = smul.addr %s716, 8
          %s718 = scalar_lea.vmem [#allocation8], %s717
          %719 = dma.done %s715, 128
        $region52: #{tpu_custom_call.1} parent=47 // pred_fallthru
          _
      $region48: #{tpu_custom_call.1} parent=5 // pred_fallthru
        _
    $region6: #{tpu_custom_call.1} parent=1 // loop_footer
      %s20 = sadd.s32 1, %s16
    $region7: #{tpu_custom_call.1} parent=1 // loop_footer_branch
      %15 = sbr.rel target = $region3
    $region8: #{tpu_custom_call.1} parent=1 // loop_exit
      _
    %720 = vsyncpa [#allocation4], 1
    %s721 = scalar_lea.sflag [#allocation4], 1
    %722 = vsyncpa %s721, 1
    %723 = vsyncpa [#allocation7], 1
    %724 = vsyncpa [#allocation5], 1
    %s725 = scalar_lea.sflag [#allocation5], 1
    %726 = vsyncpa %s725, 1

</llo_original>
